<compile_context>
chip_gen: v6e
topology: v6e:2x2x1
jax: 0.10.0
libtpu: 0.0.40
codegen_flags: <defaults>
</compile_context>

<pallas_src>
import jax
import jax.numpy as jnp
from jax.experimental import pallas as pl
from jax.experimental.pallas import tpu as pltpu

NUM_LOCATIONS = 33   # len(location_mapping)
K_PAD = 128          # contraction dim padded 33 -> 128 (zero rows in W1)
HIDDEN = 128         # Linear(33,128) -> ReLU -> Linear(128,128)
MAX_TM = 512         # batch tile: ~85% HBM roofline for the activation stream


def _round_up(n, m):
    return ((n + m - 1) // m) * m


def _loc_mlp_kernel(x_ref, w1_ref, b1_ref, w2_ref, b2_ref, out_ref):
    # x:  [TM, 128]  bf16      w1: [128, 128] bf16   b1: [1, 128] f32
    # w2: [128, 128] bf16      b2: [1, 128]  f32     out: [TM, 128] f32
    h = jnp.dot(x_ref[...], w1_ref[...], preferred_element_type=jnp.float32)
    h = jnp.maximum(h + b1_ref[...], 0.0)                 # f32 bias + ReLU
    y = jnp.dot(h.astype(w2_ref.dtype), w2_ref[...],      # bf16 in, f32 acc
                preferred_element_type=jnp.float32)
    out_ref[...] = (y + b2_ref[...]).astype(out_ref.dtype)


@jax.jit
def loc_embedding_pallas(x, w1_pad_bf16, b1, w2_bf16, b2):
    """Pallas MLP: Linear(33,128) -> ReLU -> Linear(128,128), f32 output.

    x: [B, 33] f32 (or bf16).  w1_pad_bf16: [128, 128] bf16 (rows 33..127 zero).
    """
    B, K = x.shape
    assert K == NUM_LOCATIONS

    TM = min(MAX_TM, _round_up(B, 8))
    B_pad = _round_up(B, TM)
    n_blocks = B_pad // TM

    # Pad batch to a multiple of TM and contraction to 128, cast to bf16.
    x_p = jnp.zeros((B_pad, K_PAD), dtype=jnp.bfloat16)
    x_p = x_p.at[:B, :K].set(x.astype(jnp.bfloat16))

    flops = 2 * B_pad * (K_PAD * HIDDEN + HIDDEN * HIDDEN)
    bytes_accessed = (
        (K_PAD * HIDDEN + HIDDEN * HIDDEN) * 2   # bf16 weights
        + 2 * HIDDEN * 4                         # f32 biases
        + B_pad * K_PAD * 2                      # bf16 activation stream in
        + B_pad * HIDDEN * 4                     # f32 output
    )

    out = pl.pallas_call(
        _loc_mlp_kernel,
        out_shape=jax.ShapeDtypeStruct((B_pad, HIDDEN), jnp.float32),
        grid=(n_blocks,),
        in_specs=[
            pl.BlockSpec((TM, K_PAD), lambda i: (i, 0)),         # x: tiled on batch
            pl.BlockSpec((K_PAD, HIDDEN), lambda i: (0, 0)),     # W1: resident
            pl.BlockSpec((1, HIDDEN), lambda i: (0, 0)),         # b1: resident
            pl.BlockSpec((HIDDEN, HIDDEN), lambda i: (0, 0)),    # W2: resident
            pl.BlockSpec((1, HIDDEN), lambda i: (0, 0)),         # b2: resident
        ],
        out_specs=pl.BlockSpec((TM, HIDDEN), lambda i: (i, 0)),
        compiler_params=pltpu.CompilerParams(
            dimension_semantics=("parallel",)),                  # megacore on v7x
        cost_estimate=pl.CostEstimate(
            flops=flops, transcendentals=0, bytes_accessed=bytes_accessed),
    )(x_p, w1_pad_bf16, b1, w2_bf16, b2)

    return out[:B]


class HPAClassEmbedderPallas:
    """JAX/Pallas port of HPAClassEmbedder (no image_embedding_model)."""

    def __init__(self,
                 include_location=True,
                 include_ref_image=False,
                 include_cellline=True,
                 include_embed=False,
                 use_loc_embedding=True,
                 include_densenet_embedding=False,
                 key=jax.random.PRNGKey(42)):
        self.include_location = include_location
        self.include_ref_image = include_ref_image
        self.include_embed = include_embed
        self.include_cellline = include_cellline
        self.use_loc_embedding = use_loc_embedding
        self.include_densenet_embedding = include_densenet_embedding
        if self.use_loc_embedding:
            k1, k2, k3, k4 = jax.random.split(key, 4)
            # deterministic synthetic init (PyTorch-like uniform fan-in scaling)
            bound1 = 1.0 / jnp.sqrt(NUM_LOCATIONS)
            bound2 = 1.0 / jnp.sqrt(HIDDEN)
            self.w1 = jax.random.uniform(k1, (NUM_LOCATIONS, HIDDEN),
                                         jnp.float32, -bound1, bound1)
            self.b1 = jax.random.uniform(k2, (1, HIDDEN),
                                         jnp.float32, -bound1, bound1)
            self.w2 = jax.random.uniform(k3, (HIDDEN, HIDDEN),
                                         jnp.float32, -bound2, bound2)
            self.b2 = jax.random.uniform(k4, (1, HIDDEN),
                                         jnp.float32, -bound2, bound2)
            # Kernel-side copies: K padded to 128, bf16 in HBM (halves weight DMA).
            w1_pad = jnp.zeros((K_PAD, HIDDEN), jnp.float32)
            w1_pad = w1_pad.at[:NUM_LOCATIONS, :].set(self.w1)
            self.w1_pad_bf16 = w1_pad.astype(jnp.bfloat16)
            self.w2_bf16 = self.w2.astype(jnp.bfloat16)
        # TODO(synk): image_embedding_model.encode / decode (external submodule,
        # not defined by this module's __init__) is not reimplemented here.

    def forward(self, batch):
        embed = []
        if self.include_cellline:
            embed.append(batch['cell-line'])
        if self.include_embed:
            embed.append(batch['embed'])
        if self.include_location:
            if self.use_loc_embedding:
                embed.append(loc_embedding_pallas(
                    batch['location_classes'],
                    self.w1_pad_bf16, self.b1, self.w2_bf16, self.b2))
            else:
                embed.append(batch['location_classes'])
        if self.include_densenet_embedding:
            embed.append(batch['densent_avg'])
        if self.include_ref_image:
            # TODO(synk): ref-image branch requires image_embedding_model.encode.
            raise NotImplementedError
        return {'c_crossattn': embed}


if __name__ == "__main__":
    key = jax.random.PRNGKey(0)
    k_cell, k_loc, k_params = jax.random.split(key, 3)

    B = 8
    # cell-line: one-hot-ish feature vector, passed through unchanged
    cell_line = jax.random.normal(k_cell, (B, 40), dtype=jnp.float32)
    # location_classes: multi-hot over the 33 location classes
    location_classes = (jax.random.uniform(k_loc, (B, NUM_LOCATIONS)) > 0.8
                        ).astype(jnp.float32)

    batch = {'cell-line': cell_line, 'location_classes': location_classes}

    embedder = HPAClassEmbedderPallas(include_location=True,
                                      include_cellline=True,
                                      use_loc_embedding=True,
                                      key=jax.random.fold_in(k_params, 7))

    out = embedder.forward(batch)
    for t in out['c_crossattn']:
        jax.block_until_ready(t)

    assert out['c_crossattn'][0].shape == (B, 40)
    assert out['c_crossattn'][1].shape == (B, HIDDEN)

    # Reference check: mirror the kernel's numerics (bf16 operands, f32 accum).
    xq = location_classes.astype(jnp.bfloat16).astype(jnp.float32)
    w1q = embedder.w1.astype(jnp.bfloat16).astype(jnp.float32)
    w2q = embedder.w2.astype(jnp.bfloat16).astype(jnp.float32)
    h_ref = jnp.maximum(xq @ w1q + embedder.b1, 0.0)
    ref_bf16 = h_ref.astype(jnp.bfloat16).astype(jnp.float32) @ w2q + embedder.b2
    assert jnp.allclose(out['c_crossattn'][1], ref_bf16, atol=2e-2, rtol=2e-2)

    # Looser sanity check against the pure-f32 PyTorch-equivalent math.
    ref_f32 = jnp.maximum(location_classes @ embedder.w1 + embedder.b1, 0.0) \
              @ embedder.w2 + embedder.b2
    assert jnp.allclose(out['c_crossattn'][1], ref_f32, atol=5e-2, rtol=5e-2)

    print("KERNEL_OK")
</pallas_src>

<mosaic_0001>
module attributes {stable_mosaic.version = 11 : i64} {
  func.func @_loc_mlp_kernel(%arg0: i32, %arg1: memref<8x128xbf16, #tpu.memory_space<vmem>>, %arg2: memref<128x128xbf16, #tpu.memory_space<vmem>>, %arg3: memref<1x128xf32, #tpu.memory_space<vmem>>, %arg4: memref<128x128xbf16, #tpu.memory_space<vmem>>, %arg5: memref<1x128xf32, #tpu.memory_space<vmem>>, %arg6: memref<8x128xf32, #tpu.memory_space<vmem>>) attributes {dimension_semantics = [#tpu.dimension_semantics<parallel>], iteration_bounds = array<i64: 1>, scalar_prefetch = 0 : i64, scratch_operands = 0 : i64, tpu.core_type = #tpu.core_type<tc>, window_params = [{transform_indices = @transform_0, window_bounds = array<i64: 8, 128>}, {pipeline_mode = #tpu.pipeline_mode<synchronous>, transform_indices = @transform_1, window_bounds = array<i64: 128, 128>}, {pipeline_mode = #tpu.pipeline_mode<synchronous>, transform_indices = @transform_2, window_bounds = array<i64: 1, 128>}, {pipeline_mode = #tpu.pipeline_mode<synchronous>, transform_indices = @transform_3, window_bounds = array<i64: 128, 128>}, {pipeline_mode = #tpu.pipeline_mode<synchronous>, transform_indices = @transform_4, window_bounds = array<i64: 1, 128>}, {transform_indices = @transform_5, window_bounds = array<i64: 8, 128>}]} {
    %c0 = arith.constant 0 : index
    %c0_0 = arith.constant 0 : index
    %0 = vector.load %arg1[%c0, %c0_0] : memref<8x128xbf16, #tpu.memory_space<vmem>>, vector<8x128xbf16>
    %c0_1 = arith.constant 0 : index
    %c0_2 = arith.constant 0 : index
    %1 = vector.load %arg2[%c0_1, %c0_2] : memref<128x128xbf16, #tpu.memory_space<vmem>>, vector<128x128xbf16>
    %cst = arith.constant dense<0.000000e+00> : vector<8x128xf32>
    %2 = tpu.matmul %0, %1, %cst {dimension_numbers = #tpu.dot_dimension_numbers<[1], [0], [0], [1], [0, 0, 1, 1], [], []>} : vector<8x128xbf16>, vector<128x128xbf16>, vector<8x128xf32> -> vector<8x128xf32>
    %c0_3 = arith.constant 0 : index
    %c0_4 = arith.constant 0 : index
    %3 = vector.load %arg3[%c0_3, %c0_4] : memref<1x128xf32, #tpu.memory_space<vmem>>, vector<1x128xf32>
    %4 = vector.broadcast %3 : vector<1x128xf32> to vector<8x128xf32>
    %5 = arith.addf %2, %4 : vector<8x128xf32>
    %cst_5 = arith.constant 0.000000e+00 : f32
    %6 = vector.broadcast %cst_5 : f32 to vector<8x128xf32>
    %7 = arith.maximumf %5, %6 : vector<8x128xf32>
    %8 = arith.truncf %7 : vector<8x128xf32> to vector<8x128xbf16>
    %c0_6 = arith.constant 0 : index
    %c0_7 = arith.constant 0 : index
    %9 = vector.load %arg4[%c0_6, %c0_7] : memref<128x128xbf16, #tpu.memory_space<vmem>>, vector<128x128xbf16>
    %cst_8 = arith.constant dense<0.000000e+00> : vector<8x128xf32>
    %10 = tpu.matmul %8, %9, %cst_8 {dimension_numbers = #tpu.dot_dimension_numbers<[1], [0], [0], [1], [0, 0, 1, 1], [], []>} : vector<8x128xbf16>, vector<128x128xbf16>, vector<8x128xf32> -> vector<8x128xf32>
    %c0_9 = arith.constant 0 : index
    %c0_10 = arith.constant 0 : index
    %11 = vector.load %arg5[%c0_9, %c0_10] : memref<1x128xf32, #tpu.memory_space<vmem>>, vector<1x128xf32>
    %12 = vector.broadcast %11 : vector<1x128xf32> to vector<8x128xf32>
    %13 = arith.addf %10, %12 : vector<8x128xf32>
    %c0_11 = arith.constant 0 : index
    %c0_12 = arith.constant 0 : index
    %14 = vector.load %arg6[%c0_11, %c0_12] : memref<8x128xf32, #tpu.memory_space<vmem>>, vector<8x128xf32>
    tpu.vector_store %arg6[%c0_11, %c0_12], %13 {strides = array<i32>} : memref<8x128xf32, #tpu.memory_space<vmem>>, vector<8x128xf32>,
    return
  }
  func.func @transform_0(%arg0: i32) -> (i32, i32) {
    %c0_i32 = arith.constant 0 : i32
    %c0_i32_0 = arith.constant 0 : i32
    return %arg0, %c0_i32 : i32, i32
  }
  func.func @transform_1(%arg0: i32) -> (i32, i32) {
    %c0_i32 = arith.constant 0 : i32
    %c0_i32_0 = arith.constant 0 : i32
    %c0_i32_1 = arith.constant 0 : i32
    return %c0_i32, %c0_i32_0 : i32, i32
  }
  func.func @transform_2(%arg0: i32) -> (i32, i32) {
    %c0_i32 = arith.constant 0 : i32
    %c0_i32_0 = arith.constant 0 : i32
    %c0_i32_1 = arith.constant 0 : i32
    return %c0_i32, %c0_i32_0 : i32, i32
  }
  func.func @transform_3(%arg0: i32) -> (i32, i32) {
    %c0_i32 = arith.constant 0 : i32
    %c0_i32_0 = arith.constant 0 : i32
    %c0_i32_1 = arith.constant 0 : i32
    return %c0_i32, %c0_i32_0 : i32, i32
  }
  func.func @transform_4(%arg0: i32) -> (i32, i32) {
    %c0_i32 = arith.constant 0 : i32
    %c0_i32_0 = arith.constant 0 : i32
    %c0_i32_1 = arith.constant 0 : i32
    return %c0_i32, %c0_i32_0 : i32, i32
  }
  func.func @transform_5(%arg0: i32) -> (i32, i32) {
    %c0_i32 = arith.constant 0 : i32
    %c0_i32_0 = arith.constant 0 : i32
    return %arg0, %c0_i32 : i32, i32
  }
}

</mosaic_0001>

<llo_original>
// kernel: loc_embedding_pallas.1
$region0: #{loc_embedding_pallas.1}
  #allocation0 [shape = 'u32[]', space=smem, size = 0x4, offset = 0x4, fixed_abs, tag = 'smem constant byte address 0x4 - core index']
  #allocation1 [shape = 'u32[144,128]{1,0:T(1,128)}', space=vmem, size = 0x12000, scoped, tag = 'internal scratch']
  %s0 = inlined_call_operand.vmem [shape: bf16[8,128], index: 0, kind: input, shape index: {}]
  %s1 = inlined_call_operand.hbm [shape: bf16[128,128], index: 1, kind: input, shape index: {}]
  %s2 = inlined_call_operand.vmem [shape: f32[1,128], index: 2, kind: input, shape index: {}]
  %s3 = inlined_call_operand.hbm [shape: bf16[128,128], index: 3, kind: input, shape index: {}]
  %s4 = inlined_call_operand.vmem [shape: f32[1,128], index: 4, kind: input, shape index: {}]
  %s5 = inlined_call_operand.hbm [shape: f32[8,128], index: 5, kind: output, shape index: {}]
  %s6 = sld [smem:[#allocation0]]
  $region38: #{loc_embedding_pallas.1} parent=0
    _
  %s8 = ssub.s32 1, %s6
  %s9 = scalar_select 0, %s8, %s6
  $region1: #{loc_embedding_pallas.1} parent=0
    #allocation2 [shape = 'u8[32768]{0}', space=vmem, size = 0x8000, scoped, tag = 'input window, operand 1, single buffered']
    #allocation3 [shape = 's32[1]{0}', space=sflag, size = 0x4, scoped, tag = 'scoped memory for loc_embedding_pallas.1']
    #allocation4 [shape = 's32[1]{0}', space=sflag, size = 0x4, scoped, tag = 'scoped memory for loc_embedding_pallas.1']
    #allocation5 [shape = 'u8[32768]{0}', space=vmem, size = 0x8000, scoped, tag = 'input window, operand 3, single buffered']
    #allocation6 [shape = 's32[1]{0}', space=sflag, size = 0x4, scoped, tag = 'scoped memory for loc_embedding_pallas.1']
    #allocation7 [shape = 'u8[4096]{0}', space=vmem, size = 0x1000, scoped, tag = 'output window, operand 0, single buffered']
    %10 = vsyncpa [#allocation3], 0
    %11 = vsyncpa [#allocation6], 0
    %12 = vsyncpa [#allocation4], 0
    // Predicated region
    $region2: #{loc_embedding_pallas.1} parent=1 // pred_check
      _
    $region3: #{loc_embedding_pallas.1} parent=1 // pred_check_branch
      %14 = sbr.rel (0) target = $region5
    $region4: #{loc_embedding_pallas.1} parent=1 // pred_region
      _
    $region5: #{loc_embedding_pallas.1} parent=1 // pred_fallthru
      _
    // Predicated region
    $region6: #{loc_embedding_pallas.1} parent=1 // pred_check
      _
    $region7: #{loc_embedding_pallas.1} parent=1 // pred_check_branch
      %16 = sbr.rel (0) target = $region9
    $region8: #{loc_embedding_pallas.1} parent=1 // pred_region
      %s18 = ssub.s32 1024, 1024
      %19 = vsyncadd [#allocation3], %s18
      %s20 = sshll.u32 [#allocation2], 4
      %s21 = int_to_ptr.vmem [resolvable:$true] %s20
      %26 = dma.hbm_to_vmem [thread:$0]  %s1, 1024, %s21, [#allocation3], 64, 64, 4
    $region9: #{loc_embedding_pallas.1} parent=1 // pred_fallthru
      _
    // Predicated region
    $region10: #{loc_embedding_pallas.1} parent=1 // pred_check
      _
    $region11: #{loc_embedding_pallas.1} parent=1 // pred_check_branch
      %28 = sbr.rel (0) target = $region13
    $region12: #{loc_embedding_pallas.1} parent=1 // pred_region
      _
    $region13: #{loc_embedding_pallas.1} parent=1 // pred_fallthru
      _
    // Predicated region
    $region14: #{loc_embedding_pallas.1} parent=1 // pred_check
      _
    $region15: #{loc_embedding_pallas.1} parent=1 // pred_check_branch
      %30 = sbr.rel (0) target = $region17
    $region16: #{loc_embedding_pallas.1} parent=1 // pred_region
      %s32 = ssub.s32 1024, 1024
      %33 = vsyncadd [#allocation6], %s32
      %s34 = sshll.u32 [#allocation5], 4
      %s35 = int_to_ptr.vmem [resolvable:$true] %s34
      %40 = dma.hbm_to_vmem [thread:$0]  %s3, 1024, %s35, [#allocation6], 64, 64, 4
    $region17: #{loc_embedding_pallas.1} parent=1 // pred_fallthru
      _
    // Predicated region
    $region18: #{loc_embedding_pallas.1} parent=1 // pred_check
      _
    $region19: #{loc_embedding_pallas.1} parent=1 // pred_check_branch
      %42 = sbr.rel (0) target = $region21
    $region20: #{loc_embedding_pallas.1} parent=1 // pred_region
      _
    $region21: #{loc_embedding_pallas.1} parent=1 // pred_fallthru
      _
    // Predicated region
    $region22: #{loc_embedding_pallas.1} parent=1 // pred_check
      _
    $region23: #{loc_embedding_pallas.1} parent=1 // pred_check_branch
      %44 = sbr.rel (0) target = $region25
    $region24: #{loc_embedding_pallas.1} parent=1 // pred_region
      %45 = dma.done [#allocation3], 1024
    $region25: #{loc_embedding_pallas.1} parent=1 // pred_fallthru
      _
    // Predicated region
    $region26: #{loc_embedding_pallas.1} parent=1 // pred_check
      _
    $region27: #{loc_embedding_pallas.1} parent=1 // pred_check_branch
      %47 = sbr.rel (0) target = $region29
    $region28: #{loc_embedding_pallas.1} parent=1 // pred_region
      %48 = dma.done [#allocation6], 1024
    $region29: #{loc_embedding_pallas.1} parent=1 // pred_fallthru
      _
    %v50 = vld [vmem:[%s0] sm:$0xf]
    %v51 = vld [vmem:[#allocation2] sm:$0xf]
    %v52 = vld [vmem:[#allocation2 + $0x4] sm:$0xf]
    %v53 = vld [vmem:[#allocation2 + $0x8] sm:$0xf]
    %v54 = vld [vmem:[#allocation2 + $0xc] sm:$0xf]
    %v55 = vld [vmem:[#allocation2 + $0x10] sm:$0xf]
    %v56 = vld [vmem:[#allocation2 + $0x14] sm:$0xf]
    %v57 = vld [vmem:[#allocation2 + $0x18] sm:$0xf]
    %v58 = vld [vmem:[#allocation2 + $0x1c] sm:$0xf]
    %v59 = vld [vmem:[#allocation2 + $0x20] sm:$0xf]
    %v60 = vld [vmem:[#allocation2 + $0x24] sm:$0xf]
    %v61 = vld [vmem:[#allocation2 + $0x28] sm:$0xf]
    %v62 = vld [vmem:[#allocation2 + $0x2c] sm:$0xf]
    %v63 = vld [vmem:[#allocation2 + $0x30] sm:$0xf]
    %v64 = vld [vmem:[#allocation2 + $0x34] sm:$0xf]
    %v65 = vld [vmem:[#allocation2 + $0x38] sm:$0xf]
    %v66 = vld [vmem:[#allocation2 + $0x3c] sm:$0xf]
    %v67 = vld [vmem:[%s2] sm:$0x1]
    %v69 = vlaneseq
    %v70 = vshrl.u32 %v69, 7
    %v71 = vsub.s32 0, %v70
    %v72 = vrot.slane %v67, %v71
    %v90 = vunpack.c.l.b16 %v51
    %v91 = vunpack.c.l.b16 %v52
    %v92 = vunpack.c.l.b16 %v53
    %v93 = vunpack.c.l.b16 %v54
    %v94 = vunpack.c.l.b16 %v55
    %v95 = vunpack.c.l.b16 %v56
    %v96 = vunpack.c.l.b16 %v57
    %v97 = vunpack.c.l.b16 %v58
    %v98 = vunpack.c.l.b16 %v59
    %v99 = vunpack.c.l.b16 %v60
    %v100 = vunpack.c.l.b16 %v61
    %v101 = vunpack.c.l.b16 %v62
    %v102 = vunpack.c.l.b16 %v63
    %v103 = vunpack.c.l.b16 %v64
    %v104 = vunpack.c.l.b16 %v65
    %v105 = vunpack.c.l.b16 %v66
    %v106 = vpack.c.b16 %v91, %v90
    %v107 = vpack.c.b16 %v93, %v92
    %v108 = vpack.c.b16 %v95, %v94
    %v109 = vpack.c.b16 %v97, %v96
    %v110 = vpack.c.b16 %v99, %v98
    %v111 = vpack.c.b16 %v101, %v100
    %v112 = vpack.c.b16 %v103, %v102
    %v113 = vpack.c.b16 %v105, %v104
    %122 = vmatprep.subr.bf16.mxu0 0
    %123 = vmatpush1.bf16.msra.mxu0 %v113
    %124 = vmatprep.subr.bf16.mxu0 0
    %125 = vmatpush1.bf16.msra.mxu0 %v112
    %126 = vmatprep.subr.bf16.mxu0 0
    %127 = vmatpush1.bf16.msra.mxu0 %v111
    %128 = vmatprep.subr.bf16.mxu0 0
    %129 = vmatpush1.bf16.msra.mxu0 %v110
    %130 = vmatprep.subr.bf16.mxu0 0
    %131 = vmatpush1.bf16.msra.mxu0 %v109
    %132 = vmatprep.subr.bf16.mxu0 0
    %133 = vmatpush1.bf16.msra.mxu0 %v108
    %134 = vmatprep.subr.bf16.mxu0 0
    %135 = vmatpush1.bf16.msra.mxu0 %v107
    %136 = vmatprep.subr.bf16.mxu0 0
    %137 = vmatpush1.bf16.msra.mxu0 %v106
    %138 = vmatprep.subr.bf16.mxu0 0
    %139 = vmatpush2.bf16.msra.mxu0 0
    %140 = vmatprep.subr.bf16.mxu0 0
    %141 = vmatpush2.bf16.msra.mxu0 0
    %142 = vmatprep.subr.bf16.mxu0 0
    %143 = vmatpush2.bf16.msra.mxu0 0
    %144 = vmatprep.subr.bf16.mxu0 0
    %145 = vmatpush2.bf16.msra.mxu0 0
    %146 = vmatprep.subr.bf16.mxu0 0
    %147 = vmatpush2.bf16.msra.mxu0 0
    %148 = vmatprep.subr.bf16.mxu0 0
    %149 = vmatpush2.bf16.msra.mxu0 0
    %150 = vmatprep.subr.bf16.mxu0 0
    %151 = vmatpush2.bf16.msra.mxu0 0
    %152 = vmatprep.subr.bf16.mxu0 0
    %153 = vmatpush2.bf16.msra.mxu0 0
    %154 = vmatprep.mubr.bf16.mxu0 0
    %155 = vmatmul.mubr.bf16.gmra.mxu0 %v50
    %v156 = vpop.f32.mrf.mxu0
    %v157 = vadd.f32 %v72, %v156
    %v158 = vpop.f32.mrf.mxu0
    %v159 = vpop.f32.mrf.mxu0
    %v160 = vpop.f32.mrf.mxu0
    %161 = vdwg.mxu0
    %v162 = vmax.f32 %v157, 0.0
    %v163 = vpack.c.bf16 %v162, %v162
    %v164 = vld [vmem:[#allocation5] sm:$0xf]
    %v165 = vld [vmem:[#allocation5 + $0x4] sm:$0xf]
    %v166 = vld [vmem:[#allocation5 + $0x8] sm:$0xf]
    %v167 = vld [vmem:[#allocation5 + $0xc] sm:$0xf]
    %v168 = vld [vmem:[#allocation5 + $0x10] sm:$0xf]
    %v169 = vld [vmem:[#allocation5 + $0x14] sm:$0xf]
    %v170 = vld [vmem:[#allocation5 + $0x18] sm:$0xf]
    %v171 = vld [vmem:[#allocation5 + $0x1c] sm:$0xf]
    %v172 = vld [vmem:[#allocation5 + $0x20] sm:$0xf]
    %v173 = vld [vmem:[#allocation5 + $0x24] sm:$0xf]
    %v174 = vld [vmem:[#allocation5 + $0x28] sm:$0xf]
    %v175 = vld [vmem:[#allocation5 + $0x2c] sm:$0xf]
    %v176 = vld [vmem:[#allocation5 + $0x30] sm:$0xf]
    %v177 = vld [vmem:[#allocation5 + $0x34] sm:$0xf]
    %v178 = vld [vmem:[#allocation5 + $0x38] sm:$0xf]
    %v179 = vld [vmem:[#allocation5 + $0x3c] sm:$0xf]
    %v180 = vld [vmem:[%s4] sm:$0x1]
    %v182 = vlaneseq
    %v183 = vshrl.u32 %v182, 7
    %v184 = vsub.s32 0, %v183
    %v185 = vrot.slane %v180, %v184
    %v203 = vunpack.c.l.b16 %v164
    %v204 = vunpack.c.l.b16 %v165
    %v205 = vunpack.c.l.b16 %v166
    %v206 = vunpack.c.l.b16 %v167
    %v207 = vunpack.c.l.b16 %v168
    %v208 = vunpack.c.l.b16 %v169
    %v209 = vunpack.c.l.b16 %v170
    %v210 = vunpack.c.l.b16 %v171
    %v211 = vunpack.c.l.b16 %v172
    %v212 = vunpack.c.l.b16 %v173
    %v213 = vunpack.c.l.b16 %v174
    %v214 = vunpack.c.l.b16 %v175
    %v215 = vunpack.c.l.b16 %v176
    %v216 = vunpack.c.l.b16 %v177
    %v217 = vunpack.c.l.b16 %v178
    %v218 = vunpack.c.l.b16 %v179
    %v219 = vpack.c.b16 %v204, %v203
    %v220 = vpack.c.b16 %v206, %v205
    %v221 = vpack.c.b16 %v208, %v207
    %v222 = vpack.c.b16 %v210, %v209
    %v223 = vpack.c.b16 %v212, %v211
    %v224 = vpack.c.b16 %v214, %v213
    %v225 = vpack.c.b16 %v216, %v215
    %v226 = vpack.c.b16 %v218, %v217
    %235 = vmatprep.subr.bf16.mxu0 0
    %236 = vmatpush1.bf16.msra.mxu0 %v226
    %237 = vmatprep.subr.bf16.mxu0 0
    %238 = vmatpush1.bf16.msra.mxu0 %v225
    %239 = vmatprep.subr.bf16.mxu0 0
    %240 = vmatpush1.bf16.msra.mxu0 %v224
    %241 = vmatprep.subr.bf16.mxu0 0
    %242 = vmatpush1.bf16.msra.mxu0 %v223
    %243 = vmatprep.subr.bf16.mxu0 0
    %244 = vmatpush1.bf16.msra.mxu0 %v222
    %245 = vmatprep.subr.bf16.mxu0 0
    %246 = vmatpush1.bf16.msra.mxu0 %v221
    %247 = vmatprep.subr.bf16.mxu0 0
    %248 = vmatpush1.bf16.msra.mxu0 %v220
    %249 = vmatprep.subr.bf16.mxu0 0
    %250 = vmatpush1.bf16.msra.mxu0 %v219
    %251 = vmatprep.subr.bf16.mxu0 0
    %252 = vmatpush2.bf16.msra.mxu0 0
    %253 = vmatprep.subr.bf16.mxu0 0
    %254 = vmatpush2.bf16.msra.mxu0 0
    %255 = vmatprep.subr.bf16.mxu0 0
    %256 = vmatpush2.bf16.msra.mxu0 0
    %257 = vmatprep.subr.bf16.mxu0 0
    %258 = vmatpush2.bf16.msra.mxu0 0
    %259 = vmatprep.subr.bf16.mxu0 0
    %260 = vmatpush2.bf16.msra.mxu0 0
    %261 = vmatprep.subr.bf16.mxu0 0
    %262 = vmatpush2.bf16.msra.mxu0 0
    %263 = vmatprep.subr.bf16.mxu0 0
    %264 = vmatpush2.bf16.msra.mxu0 0
    %265 = vmatprep.subr.bf16.mxu0 0
    %266 = vmatpush2.bf16.msra.mxu0 0
    %267 = vmatprep.mubr.bf16.mxu0 0
    %268 = vmatmul.mubr.bf16.gmra.mxu0 %v163
    %v269 = vpop.f32.mrf.mxu0
    %v270 = vadd.f32 %v185, %v269
    %v271 = vpop.f32.mrf.mxu0
    %v272 = vpop.f32.mrf.mxu0
    %v273 = vpop.f32.mrf.mxu0
    %274 = vdwg.mxu0
    %275 = vst [vmem:[#allocation7] sm:$0xff] %v270
    // Predicated region
    $region30: #{loc_embedding_pallas.1} parent=1 // pred_check
      _
    $region31: #{loc_embedding_pallas.1} parent=1 // pred_check_branch
      %277 = sbr.rel (0) target = $region33
    $region32: #{loc_embedding_pallas.1} parent=1 // pred_region
      %s279 = ssub.s32 128, 128
      %280 = vsyncadd [#allocation4], %s279
      %s282 = sshll.u32 [#allocation7], 4
      %s283 = int_to_ptr.vmem [resolvable:$true] %s282
      %285 = dma.vmem_to_hbm [thread:$0]  %s283, 128, %s5, [#allocation4]
    $region33: #{loc_embedding_pallas.1} parent=1 // pred_fallthru
      _
    // Predicated region
    $region34: #{loc_embedding_pallas.1} parent=1 // pred_check
      _
    $region35: #{loc_embedding_pallas.1} parent=1 // pred_check_branch
      %287 = sbr.rel (0) target = $region37
    $region36: #{loc_embedding_pallas.1} parent=1 // pred_region
      %288 = dma.done [#allocation4], 128
    $region37: #{loc_embedding_pallas.1} parent=1 // pred_fallthru
      _
    %289 = vsyncpa [#allocation3], 1
    %290 = vsyncpa [#allocation6], 1
    %291 = vsyncpa [#allocation4], 1

</llo_original>
